<compile_context>
chip_gen: v6e
topology: v6e:2x2x1
jax: 0.10.0
libtpu: 0.0.40
codegen_flags: <defaults>
</compile_context>

<pallas_src>
import numpy as np
import jax
import jax.numpy as jnp
from jax.experimental import pallas as pl
from jax.experimental.pallas import tpu as pltpu

LANE = 128


# ---------------------------------------------------------------------------
# Glue: build the GCN-normalized dense adjacency (PyG gcn_norm semantics).
# ---------------------------------------------------------------------------
def build_norm_adj(edge_index, num_nodes):
    src = [int(s) for s in edge_index[0]]
    dst = [int(d) for d in edge_index[1]]
    # add_remaining_self_loops: only for nodes that do not already have one
    existing_self = {(s, d) for s, d in zip(src, dst) if s == d}
    for i in range(num_nodes):
        if (i, i) not in existing_self:
            src.append(i)
            dst.append(i)
    src = np.asarray(src, dtype=np.int64)
    dst = np.asarray(dst, dtype=np.int64)
    w = np.ones(len(src), dtype=np.float32)

    deg = np.zeros(num_nodes, dtype=np.float32)
    np.add.at(deg, dst, w)                       # in-degree on targets
    dinv_sqrt = np.zeros(num_nodes, dtype=np.float32)
    nz = deg > 0
    dinv_sqrt[nz] = 1.0 / np.sqrt(deg[nz])

    norm = dinv_sqrt[src] * dinv_sqrt[dst] * w
    a_hat = np.zeros((num_nodes, num_nodes), dtype=np.float32)
    np.add.at(a_hat, (dst, src), norm)           # aggregate source -> target
    return a_hat


def _round_up(v, m):
    return (v + m - 1) // m * m


def _pad2(x, shape):
    return jnp.pad(x, [(0, t - s) for s, t in zip(x.shape, shape)])


# ---------------------------------------------------------------------------
# Pallas kernel: both GCN layers fused in one lane/sublane-dense block.
#   A_hat arrives bf16 (storage/DMA compression) and is upcast in-kernel;
#   all matmuls accumulate in f32, bias + ReLU in f32.
# ---------------------------------------------------------------------------
def gcn_fused_kernel(a_ref, x_ref, w1_ref, b1_ref, w2_ref, b2_ref, o_ref):
    a = a_ref[...].astype(jnp.float32)                        # free VPU cast under MXU

    # Layer 1: relu(A_hat @ (X @ W1) + b1)
    xw1 = jnp.dot(x_ref[...], w1_ref[...],
                  preferred_element_type=jnp.float32)          # f32 [Np, Hp]
    h = jnp.dot(a, xw1, preferred_element_type=jnp.float32)    # f32 [Np, Hp]
    h = jnp.maximum(h + b1_ref[...], 0.0)                      # f32 bias + ReLU

    # Layer 2: A_hat @ (H @ W2) + b2
    hw2 = jnp.dot(h, w2_ref[...],
                  preferred_element_type=jnp.float32)          # f32 [Np, Cp]
    out = jnp.dot(a, hw2, preferred_element_type=jnp.float32) + b2_ref[...]

    o_ref[...] = out                                           # lane-dense full-width vst


# ---------------------------------------------------------------------------
# Model builder: pads/casts static operands once, returns a jitted forward(x).
# ---------------------------------------------------------------------------
def make_simple_gcn_forward(a_hat, w1, b1, w2, b2):
    n = a_hat.shape[0]
    f_in, hid = w1.shape
    out_c = w2.shape[1]

    n_p = _round_up(n, LANE)
    f_p = _round_up(f_in, LANE)
    h_p = _round_up(hid, LANE)
    c_p = _round_up(out_c, LANE)

    # One-time padding / casting of static operands (hoisted out of the call).
    a_p = jax.device_put(_pad2(jnp.asarray(a_hat, jnp.float32),
                               (n_p, n_p)).astype(jnp.bfloat16))
    w1_p = jax.device_put(_pad2(jnp.asarray(w1, jnp.float32), (f_p, h_p)))
    w2_p = jax.device_put(_pad2(jnp.asarray(w2, jnp.float32), (h_p, c_p)))
    b1_p = jax.device_put(_pad2(jnp.asarray(b1, jnp.float32), (1, h_p)))
    b2_p = jax.device_put(_pad2(jnp.asarray(b2, jnp.float32), (1, c_p)))

    flops = 2 * (n_p * f_p * h_p + n_p * n_p * h_p      # layer-1 matmuls
                 + n_p * h_p * c_p + n_p * n_p * c_p)    # layer-2 matmuls
    bytes_accessed = (a_p.size * 2
                      + (n_p * f_p + w1_p.size + w2_p.size
                         + b1_p.size + b2_p.size + n_p * c_p) * 4)
    cost = pl.CostEstimate(flops=flops, transcendentals=0,
                           bytes_accessed=bytes_accessed)

    vmem = pl.BlockSpec(memory_space=pltpu.MemorySpace.VMEM)
    fused_call = pl.pallas_call(
        gcn_fused_kernel,
        out_shape=jax.ShapeDtypeStruct((n_p, c_p), jnp.float32),
        in_specs=[vmem] * 6,
        out_specs=vmem,
        compiler_params=pltpu.CompilerParams(vmem_limit_bytes=16 << 20),
        cost_estimate=cost,
    )

    @jax.jit
    def forward(x):
        # Only x is padded per call; pad + kernel + un-pad slice fuse in one jit.
        x_p = _pad2(x.astype(jnp.float32), (n_p, f_p))
        out_p = fused_call(a_p, x_p, w1_p, b1_p, w2_p, b2_p)
        return out_p[:n, :out_c]

    return forward


# ---------------------------------------------------------------------------
# Pure-numpy f32 reference (only A_hat quantized through bf16, like the kernel).
# ---------------------------------------------------------------------------
def gcn_reference(x, a_hat, w1, b1, w2, b2):
    a = np.asarray(jnp.asarray(a_hat, jnp.float32)
                   .astype(jnp.bfloat16).astype(jnp.float32))
    x = np.asarray(x, np.float32)
    w1 = np.asarray(w1, np.float32)
    b1 = np.asarray(b1, np.float32)
    w2 = np.asarray(w2, np.float32)
    b2 = np.asarray(b2, np.float32)
    h = np.maximum(a @ (x @ w1) + b1, 0.0)
    return a @ (h @ w2) + b2


if __name__ == "__main__":
    # Static graph from the module (8 nodes).
    edge_index = np.array(
        [[0, 1, 2, 2, 3, 4, 5, 6, 6],
         [1, 0, 2, 3, 4, 6, 0, 5, 7]], dtype=np.int64)
    num_nodes = 8
    in_channels, hidden_channels, out_channels = 16, 32, 8

    a_hat = build_norm_adj(edge_index, num_nodes)

    # Deterministic parameter init (glorot weights, zero bias, PyG-style).
    key = jax.random.PRNGKey(0)
    k_x, k_w1, k_w2 = jax.random.split(key, 3)

    def glorot(k, shape):
        limit = np.sqrt(6.0 / (shape[0] + shape[1]))
        return jax.random.uniform(k, shape, jnp.float32, -limit, limit)

    x = jax.random.normal(k_x, (num_nodes, in_channels), jnp.float32)
    w1 = glorot(k_w1, (in_channels, hidden_channels))
    b1 = jnp.zeros((1, hidden_channels), jnp.float32)
    w2 = glorot(k_w2, (out_channels * 0 + hidden_channels, out_channels))
    b2 = jnp.zeros((1, out_channels), jnp.float32)

    forward = make_simple_gcn_forward(a_hat, w1, b1, w2, b2)

    out = forward(x)
    jax.block_until_ready(out)
    assert out.shape == (num_nodes, out_channels)

    ref = gcn_reference(np.asarray(x), a_hat, np.asarray(w1), np.asarray(b1),
                        np.asarray(w2), np.asarray(b2))
    np.testing.assert_allclose(np.asarray(out), ref, rtol=1e-2, atol=1e-2)
    print("KERNEL_OK")
</pallas_src>

<mosaic_0001>
module attributes {stable_mosaic.version = 11 : i64} {
  func.func @gcn_fused_kernel(%arg0: memref<128x128xbf16, #tpu.memory_space<vmem>>, %arg1: memref<128x128xf32, #tpu.memory_space<vmem>>, %arg2: memref<128x128xf32, #tpu.memory_space<vmem>>, %arg3: memref<1x128xf32, #tpu.memory_space<vmem>>, %arg4: memref<128x128xf32, #tpu.memory_space<vmem>>, %arg5: memref<1x128xf32, #tpu.memory_space<vmem>>, %arg6: memref<128x128xf32, #tpu.memory_space<vmem>>) attributes {dimension_semantics = [], scalar_prefetch = 0 : i64, scratch_operands = 0 : i64, tpu.core_type = #tpu.core_type<tc>} {
    %c0 = arith.constant 0 : index
    %c0_0 = arith.constant 0 : index
    %0 = vector.load %arg0[%c0, %c0_0] : memref<128x128xbf16, #tpu.memory_space<vmem>>, vector<128x128xbf16>
    %1 = arith.extf %0 : vector<128x128xbf16> to vector<128x128xf32>
    %c0_1 = arith.constant 0 : index
    %c0_2 = arith.constant 0 : index
    %2 = vector.load %arg1[%c0_1, %c0_2] : memref<128x128xf32, #tpu.memory_space<vmem>>, vector<128x128xf32>
    %c0_3 = arith.constant 0 : index
    %c0_4 = arith.constant 0 : index
    %3 = vector.load %arg2[%c0_3, %c0_4] : memref<128x128xf32, #tpu.memory_space<vmem>>, vector<128x128xf32>
    %cst = arith.constant dense<0.000000e+00> : vector<128x128xf32>
    %4 = tpu.matmul %2, %3, %cst {dimension_numbers = #tpu.dot_dimension_numbers<[1], [0], [0], [1], [0, 0, 1, 1], [], []>} : vector<128x128xf32>, vector<128x128xf32>, vector<128x128xf32> -> vector<128x128xf32>
    %cst_5 = arith.constant dense<0.000000e+00> : vector<128x128xf32>
    %5 = tpu.matmul %1, %4, %cst_5 {dimension_numbers = #tpu.dot_dimension_numbers<[1], [0], [0], [1], [0, 0, 1, 1], [], []>} : vector<128x128xf32>, vector<128x128xf32>, vector<128x128xf32> -> vector<128x128xf32>
    %c0_6 = arith.constant 0 : index
    %c0_7 = arith.constant 0 : index
    %6 = vector.load %arg3[%c0_6, %c0_7] : memref<1x128xf32, #tpu.memory_space<vmem>>, vector<1x128xf32>
    %7 = vector.broadcast %6 : vector<1x128xf32> to vector<128x128xf32>
    %8 = arith.addf %5, %7 : vector<128x128xf32>
    %cst_8 = arith.constant 0.000000e+00 : f32
    %9 = vector.broadcast %cst_8 : f32 to vector<128x128xf32>
    %10 = arith.maximumf %8, %9 : vector<128x128xf32>
    %c0_9 = arith.constant 0 : index
    %c0_10 = arith.constant 0 : index
    %11 = vector.load %arg4[%c0_9, %c0_10] : memref<128x128xf32, #tpu.memory_space<vmem>>, vector<128x128xf32>
    %cst_11 = arith.constant dense<0.000000e+00> : vector<128x128xf32>
    %12 = tpu.matmul %10, %11, %cst_11 {dimension_numbers = #tpu.dot_dimension_numbers<[1], [0], [0], [1], [0, 0, 1, 1], [], []>} : vector<128x128xf32>, vector<128x128xf32>, vector<128x128xf32> -> vector<128x128xf32>
    %cst_12 = arith.constant dense<0.000000e+00> : vector<128x128xf32>
    %13 = tpu.matmul %1, %12, %cst_12 {dimension_numbers = #tpu.dot_dimension_numbers<[1], [0], [0], [1], [0, 0, 1, 1], [], []>} : vector<128x128xf32>, vector<128x128xf32>, vector<128x128xf32> -> vector<128x128xf32>
    %c0_13 = arith.constant 0 : index
    %c0_14 = arith.constant 0 : index
    %14 = vector.load %arg5[%c0_13, %c0_14] : memref<1x128xf32, #tpu.memory_space<vmem>>, vector<1x128xf32>
    %15 = vector.broadcast %14 : vector<1x128xf32> to vector<128x128xf32>
    %16 = arith.addf %13, %15 : vector<128x128xf32>
    %c0_15 = arith.constant 0 : index
    %c0_16 = arith.constant 0 : index
    %17 = vector.load %arg6[%c0_15, %c0_16] : memref<128x128xf32, #tpu.memory_space<vmem>>, vector<128x128xf32>
    tpu.vector_store %arg6[%c0_15, %c0_16], %16 {strides = array<i32>} : memref<128x128xf32, #tpu.memory_space<vmem>>, vector<128x128xf32>,
    return
  }
}

</mosaic_0001>

<llo_original>
// kernel: forward.1
$region0: #{forward.1}
  #allocation0 [shape = 'u32[]', space=smem, size = 0x4, offset = 0x4, fixed_abs, tag = 'smem constant byte address 0x4 - core index']
  #allocation1 [shape = 'u32[144,128]{1,0:T(1,128)}', space=vmem, size = 0x12000, scoped, tag = 'internal scratch']
  %s0 = inlined_call_operand.hbm [shape: bf16[128,128], index: 0, kind: input, shape index: {}]
  %s1 = inlined_call_operand.vmem [shape: f32[128,128], index: 1, kind: input, shape index: {}]
  %s2 = inlined_call_operand.hbm [shape: f32[128,128], index: 2, kind: input, shape index: {}]
  %s3 = inlined_call_operand.vmem [shape: f32[1,128], index: 3, kind: input, shape index: {}, may-alias: {3,5}]
  %s4 = inlined_call_operand.vmem [shape: f32[128,128], index: 4, kind: input, shape index: {}]
  %s5 = inlined_call_operand.vmem [shape: f32[1,128], index: 5, kind: input, shape index: {}, may-alias: {3,5}]
  %s6 = inlined_call_operand.vmem [shape: f32[128,128], index: 6, kind: output, shape index: {}]
  %s7 = sld [smem:[#allocation0]]
  $region42: #{forward.1} parent=0
    _
  %s9 = ssub.s32 1, %s7
  %s10 = scalar_select 0, %s9, %s7
  $region1: #{forward.1} parent=0
    #allocation2 [shape = 'u8[32768]{0}', space=vmem, size = 0x8000, scoped, tag = 'input window, operand 0, single buffered']
    #allocation3 [shape = 's32[1]{0}', space=sflag, size = 0x4, scoped, tag = 'scoped memory for forward.1']
    #allocation4 [shape = 'u8[65536]{0}', space=vmem, size = 0x10000, scoped, tag = 'input window, operand 2, single buffered']
    #allocation5 [shape = 's32[1]{0}', space=sflag, size = 0x4, scoped, tag = 'scoped memory for forward.1']
    %11 = vsyncpa [#allocation3], 0
    %12 = vsyncpa [#allocation5], 0
    // Predicated region
    $region2: #{forward.1} parent=1 // pred_check
      _
    $region3: #{forward.1} parent=1 // pred_check_branch
      %14 = sbr.rel (0) target = $region5
    $region4: #{forward.1} parent=1 // pred_region
      %s16 = ssub.s32 1024, 1024
      %17 = vsyncadd [#allocation3], %s16
      %s18 = sshll.u32 [#allocation2], 4
      %s19 = int_to_ptr.vmem [resolvable:$true] %s18
      %24 = dma.hbm_to_vmem [thread:$0]  %s0, 1024, %s19, [#allocation3], 64, 64, 4
    $region5: #{forward.1} parent=1 // pred_fallthru
      _
    // Predicated region
    $region6: #{forward.1} parent=1 // pred_check
      _
    $region7: #{forward.1} parent=1 // pred_check_branch
      %26 = sbr.rel (0) target = $region9
    $region8: #{forward.1} parent=1 // pred_region
      _
    $region9: #{forward.1} parent=1 // pred_fallthru
      _
    // Predicated region
    $region10: #{forward.1} parent=1 // pred_check
      _
    $region11: #{forward.1} parent=1 // pred_check_branch
      %28 = sbr.rel (0) target = $region13
    $region12: #{forward.1} parent=1 // pred_region
      %s30 = ssub.s32 2048, 2048
      %31 = vsyncadd [#allocation5], %s30
      %s32 = sshll.u32 [#allocation4], 4
      %s33 = int_to_ptr.vmem [resolvable:$true] %s32
      %38 = dma.hbm_to_vmem [thread:$0]  %s2, 2048, %s33, [#allocation5], 128, 128, 8
    $region13: #{forward.1} parent=1 // pred_fallthru
      _
    // Predicated region
    $region14: #{forward.1} parent=1 // pred_check
      _
    $region15: #{forward.1} parent=1 // pred_check_branch
      %40 = sbr.rel (0) target = $region17
    $region16: #{forward.1} parent=1 // pred_region
      _
    $region17: #{forward.1} parent=1 // pred_fallthru
      _
    // Predicated region
    $region18: #{forward.1} parent=1 // pred_check
      _
    $region19: #{forward.1} parent=1 // pred_check_branch
      %42 = sbr.rel (0) target = $region21
    $region20: #{forward.1} parent=1 // pred_region
      _
    $region21: #{forward.1} parent=1 // pred_fallthru
      _
    // Predicated region
    $region22: #{forward.1} parent=1 // pred_check
      _
    $region23: #{forward.1} parent=1 // pred_check_branch
      %44 = sbr.rel (0) target = $region25
    $region24: #{forward.1} parent=1 // pred_region
      _
    $region25: #{forward.1} parent=1 // pred_fallthru
      _
    // Predicated region
    $region26: #{forward.1} parent=1 // pred_check
      _
    $region27: #{forward.1} parent=1 // pred_check_branch
      %46 = sbr.rel (0) target = $region29
    $region28: #{forward.1} parent=1 // pred_region
      %47 = dma.done [#allocation3], 1024
    $region29: #{forward.1} parent=1 // pred_fallthru
      _
    // Predicated region
    $region30: #{forward.1} parent=1 // pred_check
      _
    $region31: #{forward.1} parent=1 // pred_check_branch
      %49 = sbr.rel (0) target = $region33
    $region32: #{forward.1} parent=1 // pred_region
      %50 = dma.done [#allocation5], 2048
    $region33: #{forward.1} parent=1 // pred_fallthru
      _
    %v51 = vld [vmem:[#allocation2] sm:$0xf]
    %v52 = vld [vmem:[#allocation2 + $0x4] sm:$0xf]
    %v53 = vld [vmem:[#allocation2 + $0x8] sm:$0xf]
    %v54 = vld [vmem:[#allocation2 + $0xc] sm:$0xf]
    %v55 = vld [vmem:[#allocation2 + $0x10] sm:$0xf]
    %v56 = vld [vmem:[#allocation2 + $0x14] sm:$0xf]
    %v57 = vld [vmem:[#allocation2 + $0x18] sm:$0xf]
    %v58 = vld [vmem:[#allocation2 + $0x1c] sm:$0xf]
    %v59 = vld [vmem:[#allocation2 + $0x20] sm:$0xf]
    %v60 = vld [vmem:[#allocation2 + $0x24] sm:$0xf]
    %v61 = vld [vmem:[#allocation2 + $0x28] sm:$0xf]
    %v62 = vld [vmem:[#allocation2 + $0x2c] sm:$0xf]
    %v63 = vld [vmem:[#allocation2 + $0x30] sm:$0xf]
    %v64 = vld [vmem:[#allocation2 + $0x34] sm:$0xf]
    %v65 = vld [vmem:[#allocation2 + $0x38] sm:$0xf]
    %v66 = vld [vmem:[#allocation2 + $0x3c] sm:$0xf]
    %v67 = vunpack.c.l.bf16 %v51
    %v68 = vunpack.c.l.bf16 %v52
    %v69 = vunpack.c.l.bf16 %v53
    %v70 = vunpack.c.l.bf16 %v54
    %v71 = vunpack.c.l.bf16 %v55
    %v72 = vunpack.c.l.bf16 %v56
    %v73 = vunpack.c.l.bf16 %v57
    %v74 = vunpack.c.l.bf16 %v58
    %v75 = vunpack.c.l.bf16 %v59
    %v76 = vunpack.c.l.bf16 %v60
    %v77 = vunpack.c.l.bf16 %v61
    %v78 = vunpack.c.l.bf16 %v62
    %v79 = vunpack.c.l.bf16 %v63
    %v80 = vunpack.c.l.bf16 %v64
    %v81 = vunpack.c.l.bf16 %v65
    %v82 = vunpack.c.l.bf16 %v66
    %v83 = vld [vmem:[%s1] sm:$0xff]
    %v84 = vld [vmem:[%s1 + $0x8] sm:$0xff]
    %v85 = vld [vmem:[%s1 + $0x10] sm:$0xff]
    %v86 = vld [vmem:[%s1 + $0x18] sm:$0xff]
    %v87 = vld [vmem:[%s1 + $0x20] sm:$0xff]
    %v88 = vld [vmem:[%s1 + $0x28] sm:$0xff]
    %v89 = vld [vmem:[%s1 + $0x30] sm:$0xff]
    %v90 = vld [vmem:[%s1 + $0x38] sm:$0xff]
    %v91 = vld [vmem:[%s1 + $0x40] sm:$0xff]
    %v92 = vld [vmem:[%s1 + $0x48] sm:$0xff]
    %v93 = vld [vmem:[%s1 + $0x50] sm:$0xff]
    %v94 = vld [vmem:[%s1 + $0x58] sm:$0xff]
    %v95 = vld [vmem:[%s1 + $0x60] sm:$0xff]
    %v96 = vld [vmem:[%s1 + $0x68] sm:$0xff]
    %v97 = vld [vmem:[%s1 + $0x70] sm:$0xff]
    %v98 = vld [vmem:[%s1 + $0x78] sm:$0xff]
    %v99 = vld [vmem:[#allocation4] sm:$0xff]
    %v100 = vld [vmem:[#allocation4 + $0x8] sm:$0xff]
    %v101 = vld [vmem:[#allocation4 + $0x10] sm:$0xff]
    %v102 = vld [vmem:[#allocation4 + $0x18] sm:$0xff]
    %v103 = vld [vmem:[#allocation4 + $0x20] sm:$0xff]
    %v104 = vld [vmem:[#allocation4 + $0x28] sm:$0xff]
    %v105 = vld [vmem:[#allocation4 + $0x30] sm:$0xff]
    %v106 = vld [vmem:[#allocation4 + $0x38] sm:$0xff]
    %v107 = vld [vmem:[#allocation4 + $0x40] sm:$0xff]
    %v108 = vld [vmem:[#allocation4 + $0x48] sm:$0xff]
    %v109 = vld [vmem:[#allocation4 + $0x50] sm:$0xff]
    %v110 = vld [vmem:[#allocation4 + $0x58] sm:$0xff]
    %v111 = vld [vmem:[#allocation4 + $0x60] sm:$0xff]
    %v112 = vld [vmem:[#allocation4 + $0x68] sm:$0xff]
    %v113 = vld [vmem:[#allocation4 + $0x70] sm:$0xff]
    %v114 = vld [vmem:[#allocation4 + $0x78] sm:$0xff]
    %115 = vmatprep.subr.mxu0 0.0
    %116 = vmatpush1.msra.mxu0 %v114
    %117 = vmatprep.subr.mxu0 0.0
    %118 = vmatpush1.msra.mxu0 %v113
    %119 = vmatprep.subr.mxu0 0.0
    %120 = vmatpush1.msra.mxu0 %v112
    %121 = vmatprep.subr.mxu0 0.0
    %122 = vmatpush1.msra.mxu0 %v111
    %123 = vmatprep.subr.mxu0 0.0
    %124 = vmatpush1.msra.mxu0 %v110
    %125 = vmatprep.subr.mxu0 0.0
    %126 = vmatpush1.msra.mxu0 %v109
    %127 = vmatprep.subr.mxu0 0.0
    %128 = vmatpush1.msra.mxu0 %v108
    %129 = vmatprep.subr.mxu0 0.0
    %130 = vmatpush1.msra.mxu0 %v107
    %131 = vmatprep.subr.mxu0 0.0
    %132 = vmatpush1.msra.mxu0 %v106
    %133 = vmatprep.subr.mxu0 0.0
    %134 = vmatpush1.msra.mxu0 %v105
    %135 = vmatprep.subr.mxu0 0.0
    %136 = vmatpush1.msra.mxu0 %v104
    %137 = vmatprep.subr.mxu0 0.0
    %138 = vmatpush1.msra.mxu0 %v103
    %139 = vmatprep.subr.mxu0 0.0
    %140 = vmatpush1.msra.mxu0 %v102
    %141 = vmatprep.subr.mxu0 0.0
    %142 = vmatpush1.msra.mxu0 %v101
    %143 = vmatprep.subr.mxu0 0.0
    %144 = vmatpush1.msra.mxu0 %v100
    %145 = vmatprep.subr.mxu0 0.0
    %146 = vmatpush1.msra.mxu0 %v99
    %147 = vmatprep.subr.mxu0 0.0
    %148 = vmatpush2.msra.mxu0 0.0
    %149 = vmatprep.subr.mxu0 0.0
    %150 = vmatpush2.msra.mxu0 0.0
    %151 = vmatprep.subr.mxu0 0.0
    %152 = vmatpush2.msra.mxu0 0.0
    %153 = vmatprep.subr.mxu0 0.0
    %154 = vmatpush2.msra.mxu0 0.0
    %155 = vmatprep.subr.mxu0 0.0
    %156 = vmatpush2.msra.mxu0 0.0
    %157 = vmatprep.subr.mxu0 0.0
    %158 = vmatpush2.msra.mxu0 0.0
    %159 = vmatprep.subr.mxu0 0.0
    %160 = vmatpush2.msra.mxu0 0.0
    %161 = vmatprep.subr.mxu0 0.0
    %162 = vmatpush2.msra.mxu0 0.0
    %163 = vmatprep.subr.mxu0 0.0
    %164 = vmatpush2.msra.mxu0 0.0
    %165 = vmatprep.subr.mxu0 0.0
    %166 = vmatpush2.msra.mxu0 0.0
    %167 = vmatprep.subr.mxu0 0.0
    %168 = vmatpush2.msra.mxu0 0.0
    %169 = vmatprep.subr.mxu0 0.0
    %170 = vmatpush2.msra.mxu0 0.0
    %171 = vmatprep.subr.mxu0 0.0
    %172 = vmatpush2.msra.mxu0 0.0
    %173 = vmatprep.subr.mxu0 0.0
    %174 = vmatpush2.msra.mxu0 0.0
    %175 = vmatprep.subr.mxu0 0.0
    %176 = vmatpush2.msra.mxu0 0.0
    %177 = vmatprep.subr.mxu0 0.0
    %178 = vmatpush2.msra.mxu0 0.0
    %179 = vmatprep.mubr.f32.mxu0 0.0
    %180 = vmatmul.mubr.f32.gmra.mxu0 %v83
    %v181 = vpop.f32.mrf.mxu0
    %v182 = vadd.f32 0.0, %v181
    %v183 = vpop.f32.mrf.mxu0
    %184 = vmatprep.mubr.f32.mxu0 0.0
    %185 = vmatmul.mubr.f32.gmra.mxu0 %v84
    %v186 = vpop.f32.mrf.mxu0
    %v187 = vadd.f32 0.0, %v186
    %v188 = vpop.f32.mrf.mxu0
    %189 = vmatprep.mubr.f32.mxu0 0.0
    %190 = vmatmul.mubr.f32.gmra.mxu0 %v85
    %v191 = vpop.f32.mrf.mxu0
    %v192 = vadd.f32 0.0, %v191
    %v193 = vpop.f32.mrf.mxu0
    %194 = vmatprep.mubr.f32.mxu0 0.0
    %195 = vmatmul.mubr.f32.gmra.mxu0 %v86
    %v196 = vpop.f32.mrf.mxu0
    %v197 = vadd.f32 0.0, %v196
    %v198 = vpop.f32.mrf.mxu0
    %199 = vmatprep.mubr.f32.mxu0 0.0
    %200 = vmatmul.mubr.f32.gmra.mxu0 %v87
    %v201 = vpop.f32.mrf.mxu0
    %v202 = vadd.f32 0.0, %v201
    %v203 = vpop.f32.mrf.mxu0
    %204 = vmatprep.mubr.f32.mxu0 0.0
    %205 = vmatmul.mubr.f32.gmra.mxu0 %v88
    %v206 = vpop.f32.mrf.mxu0
    %v207 = vadd.f32 0.0, %v206
    %v208 = vpop.f32.mrf.mxu0
    %209 = vmatprep.mubr.f32.mxu0 0.0
    %210 = vmatmul.mubr.f32.gmra.mxu0 %v89
    %v211 = vpop.f32.mrf.mxu0
    %v212 = vadd.f32 0.0, %v211
    %v213 = vpop.f32.mrf.mxu0
    %214 = vmatprep.mubr.f32.mxu0 0.0
    %215 = vmatmul.mubr.f32.gmra.mxu0 %v90
    %v216 = vpop.f32.mrf.mxu0
    %v217 = vadd.f32 0.0, %v216
    %v218 = vpop.f32.mrf.mxu0
    %219 = vmatprep.mubr.f32.mxu0 0.0
    %220 = vmatmul.mubr.f32.gmra.mxu0 %v91
    %v221 = vpop.f32.mrf.mxu0
    %v222 = vadd.f32 0.0, %v221
    %v223 = vpop.f32.mrf.mxu0
    %224 = vmatprep.mubr.f32.mxu0 0.0
    %225 = vmatmul.mubr.f32.gmra.mxu0 %v92
    %v226 = vpop.f32.mrf.mxu0
    %v227 = vadd.f32 0.0, %v226
    %v228 = vpop.f32.mrf.mxu0
    %229 = vmatprep.mubr.f32.mxu0 0.0
    %230 = vmatmul.mubr.f32.gmra.mxu0 %v93
    %v231 = vpop.f32.mrf.mxu0
    %v232 = vadd.f32 0.0, %v231
    %v233 = vpop.f32.mrf.mxu0
    %234 = vmatprep.mubr.f32.mxu0 0.0
    %235 = vmatmul.mubr.f32.gmra.mxu0 %v94
    %v236 = vpop.f32.mrf.mxu0
    %v237 = vadd.f32 0.0, %v236
    %v238 = vpop.f32.mrf.mxu0
    %239 = vmatprep.mubr.f32.mxu0 0.0
    %240 = vmatmul.mubr.f32.gmra.mxu0 %v95
    %v241 = vpop.f32.mrf.mxu0
    %v242 = vadd.f32 0.0, %v241
    %v243 = vpop.f32.mrf.mxu0
    %244 = vmatprep.mubr.f32.mxu0 0.0
    %245 = vmatmul.mubr.f32.gmra.mxu0 %v96
    %v246 = vpop.f32.mrf.mxu0
    %v247 = vadd.f32 0.0, %v246
    %v248 = vpop.f32.mrf.mxu0
    %249 = vmatprep.mubr.f32.mxu0 0.0
    %250 = vmatmul.mubr.f32.gmra.mxu0 %v97
    %v251 = vpop.f32.mrf.mxu0
    %v252 = vadd.f32 0.0, %v251
    %v253 = vpop.f32.mrf.mxu0
    %254 = vmatprep.mubr.f32.mxu0 0.0
    %255 = vmatmul.mubr.f32.gmra.mxu0 %v98
    %v256 = vpop.f32.mrf.mxu0
    %v257 = vadd.f32 0.0, %v256
    %v258 = vpop.f32.mrf.mxu0
    %259 = vdwg.mxu0
    %v260 = vld [vmem:[%s3] sm:$0x1]
    %v262 = vlaneseq
    %v263 = vshrl.u32 %v262, 7
    %v264 = vsub.s32 0, %v263
    %v265 = vrot.slane %v260, %v264
    %267 = vmatprep.subr.mxu0 0.0
    %268 = vmatpush1.msra.mxu0 %v257
    %269 = vmatprep.subr.mxu0 0.0
    %270 = vmatpush1.msra.mxu0 %v252
    %271 = vmatprep.subr.mxu0 0.0
    %272 = vmatpush1.msra.mxu0 %v247
    %273 = vmatprep.subr.mxu0 0.0
    %274 = vmatpush1.msra.mxu0 %v242
    %275 = vmatprep.subr.mxu0 0.0
    %276 = vmatpush1.msra.mxu0 %v237
    %277 = vmatprep.subr.mxu0 0.0
    %278 = vmatpush1.msra.mxu0 %v232
    %279 = vmatprep.subr.mxu0 0.0
    %280 = vmatpush1.msra.mxu0 %v227
    %281 = vmatprep.subr.mxu0 0.0
    %282 = vmatpush1.msra.mxu0 %v222
    %283 = vmatprep.subr.mxu0 0.0
    %284 = vmatpush1.msra.mxu0 %v217
    %285 = vmatprep.subr.mxu0 0.0
    %286 = vmatpush1.msra.mxu0 %v212
    %287 = vmatprep.subr.mxu0 0.0
    %288 = vmatpush1.msra.mxu0 %v207
    %289 = vmatprep.subr.mxu0 0.0
    %290 = vmatpush1.msra.mxu0 %v202
    %291 = vmatprep.subr.mxu0 0.0
    %292 = vmatpush1.msra.mxu0 %v197
    %293 = vmatprep.subr.mxu0 0.0
    %294 = vmatpush1.msra.mxu0 %v192
    %295 = vmatprep.subr.mxu0 0.0
    %296 = vmatpush1.msra.mxu0 %v187
    %297 = vmatprep.subr.mxu0 0.0
    %298 = vmatpush1.msra.mxu0 %v182
    %299 = vmatprep.subr.mxu0 0.0
    %300 = vmatpush2.msra.mxu0 0.0
    %301 = vmatprep.subr.mxu0 0.0
    %302 = vmatpush2.msra.mxu0 0.0
    %303 = vmatprep.subr.mxu0 0.0
    %304 = vmatpush2.msra.mxu0 0.0
    %305 = vmatprep.subr.mxu0 0.0
    %306 = vmatpush2.msra.mxu0 0.0
    %307 = vmatprep.subr.mxu0 0.0
    %308 = vmatpush2.msra.mxu0 0.0
    %309 = vmatprep.subr.mxu0 0.0
    %310 = vmatpush2.msra.mxu0 0.0
    %311 = vmatprep.subr.mxu0 0.0
    %312 = vmatpush2.msra.mxu0 0.0
    %313 = vmatprep.subr.mxu0 0.0
    %314 = vmatpush2.msra.mxu0 0.0
    %315 = vmatprep.subr.mxu0 0.0
    %316 = vmatpush2.msra.mxu0 0.0
    %317 = vmatprep.subr.mxu0 0.0
    %318 = vmatpush2.msra.mxu0 0.0
    %319 = vmatprep.subr.mxu0 0.0
    %320 = vmatpush2.msra.mxu0 0.0
    %321 = vmatprep.subr.mxu0 0.0
    %322 = vmatpush2.msra.mxu0 0.0
    %323 = vmatprep.subr.mxu0 0.0
    %324 = vmatpush2.msra.mxu0 0.0
    %325 = vmatprep.subr.mxu0 0.0
    %326 = vmatpush2.msra.mxu0 0.0
    %327 = vmatprep.subr.mxu0 0.0
    %328 = vmatpush2.msra.mxu0 0.0
    %329 = vmatprep.subr.mxu0 0.0
    %330 = vmatpush2.msra.mxu0 0.0
    %331 = vmatprep.mubr.f32.mxu0 0.0
    %332 = vmatmul.mubr.f32.gmra.mxu0 %v67
    %v333 = vpop.f32.mrf.mxu0
    %v334 = vadd.f32 %v265, %v333
    %v335 = vpop.f32.mrf.mxu0
    %336 = vmatprep.mubr.f32.mxu0 0.0
    %337 = vmatmul.mubr.f32.gmra.mxu0 %v68
    %v338 = vpop.f32.mrf.mxu0
    %v339 = vadd.f32 %v265, %v338
    %v340 = vpop.f32.mrf.mxu0
    %341 = vmatprep.mubr.f32.mxu0 0.0
    %342 = vmatmul.mubr.f32.gmra.mxu0 %v69
    %v343 = vpop.f32.mrf.mxu0
    %v344 = vadd.f32 %v265, %v343
    %v345 = vpop.f32.mrf.mxu0
    %346 = vmatprep.mubr.f32.mxu0 0.0
    %347 = vmatmul.mubr.f32.gmra.mxu0 %v70
    %v348 = vpop.f32.mrf.mxu0
    %v349 = vadd.f32 %v265, %v348
    %v350 = vpop.f32.mrf.mxu0
    %351 = vmatprep.mubr.f32.mxu0 0.0
    %352 = vmatmul.mubr.f32.gmra.mxu0 %v71
    %v353 = vpop.f32.mrf.mxu0
    %v354 = vadd.f32 %v265, %v353
    %v355 = vpop.f32.mrf.mxu0
    %356 = vmatprep.mubr.f32.mxu0 0.0
    %357 = vmatmul.mubr.f32.gmra.mxu0 %v72
    %v358 = vpop.f32.mrf.mxu0
    %v359 = vadd.f32 %v265, %v358
    %v360 = vpop.f32.mrf.mxu0
    %361 = vmatprep.mubr.f32.mxu0 0.0
    %362 = vmatmul.mubr.f32.gmra.mxu0 %v73
    %v363 = vpop.f32.mrf.mxu0
    %v364 = vadd.f32 %v265, %v363
    %v365 = vpop.f32.mrf.mxu0
    %366 = vmatprep.mubr.f32.mxu0 0.0
    %367 = vmatmul.mubr.f32.gmra.mxu0 %v74
    %v368 = vpop.f32.mrf.mxu0
    %v369 = vadd.f32 %v265, %v368
    %v370 = vpop.f32.mrf.mxu0
    %371 = vmatprep.mubr.f32.mxu0 0.0
    %372 = vmatmul.mubr.f32.gmra.mxu0 %v75
    %v373 = vpop.f32.mrf.mxu0
    %v374 = vadd.f32 %v265, %v373
    %v375 = vpop.f32.mrf.mxu0
    %376 = vmatprep.mubr.f32.mxu0 0.0
    %377 = vmatmul.mubr.f32.gmra.mxu0 %v76
    %v378 = vpop.f32.mrf.mxu0
    %v379 = vadd.f32 %v265, %v378
    %v380 = vpop.f32.mrf.mxu0
    %381 = vmatprep.mubr.f32.mxu0 0.0
    %382 = vmatmul.mubr.f32.gmra.mxu0 %v77
    %v383 = vpop.f32.mrf.mxu0
    %v384 = vadd.f32 %v265, %v383
    %v385 = vpop.f32.mrf.mxu0
    %386 = vmatprep.mubr.f32.mxu0 0.0
    %387 = vmatmul.mubr.f32.gmra.mxu0 %v78
    %v388 = vpop.f32.mrf.mxu0
    %v389 = vadd.f32 %v265, %v388
    %v390 = vpop.f32.mrf.mxu0
    %391 = vmatprep.mubr.f32.mxu0 0.0
    %392 = vmatmul.mubr.f32.gmra.mxu0 %v79
    %v393 = vpop.f32.mrf.mxu0
    %v394 = vadd.f32 %v265, %v393
    %v395 = vpop.f32.mrf.mxu0
    %396 = vmatprep.mubr.f32.mxu0 0.0
    %397 = vmatmul.mubr.f32.gmra.mxu0 %v80
    %v398 = vpop.f32.mrf.mxu0
    %v399 = vadd.f32 %v265, %v398
    %v400 = vpop.f32.mrf.mxu0
    %401 = vmatprep.mubr.f32.mxu0 0.0
    %402 = vmatmul.mubr.f32.gmra.mxu0 %v81
    %v403 = vpop.f32.mrf.mxu0
    %v404 = vadd.f32 %v265, %v403
    %v405 = vpop.f32.mrf.mxu0
    %406 = vmatprep.mubr.f32.mxu0 0.0
    %407 = vmatmul.mubr.f32.gmra.mxu0 %v82
    %v408 = vpop.f32.mrf.mxu0
    %v409 = vadd.f32 %v265, %v408
    %v410 = vpop.f32.mrf.mxu0
    %411 = vdwg.mxu0
    %v412 = vmax.f32 %v334, 0.0
    %v413 = vmax.f32 %v339, 0.0
    %v414 = vmax.f32 %v344, 0.0
    %v415 = vmax.f32 %v349, 0.0
    %v416 = vmax.f32 %v354, 0.0
    %v417 = vmax.f32 %v359, 0.0
    %v418 = vmax.f32 %v364, 0.0
    %v419 = vmax.f32 %v369, 0.0
    %v420 = vmax.f32 %v374, 0.0
    %v421 = vmax.f32 %v379, 0.0
    %v422 = vmax.f32 %v384, 0.0
    %v423 = vmax.f32 %v389, 0.0
    %v424 = vmax.f32 %v394, 0.0
    %v425 = vmax.f32 %v399, 0.0
    %v426 = vmax.f32 %v404, 0.0
    %v427 = vmax.f32 %v409, 0.0
    %v428 = vld [vmem:[%s4] sm:$0xff]
    %v429 = vld [vmem:[%s4 + $0x8] sm:$0xff]
    %v430 = vld [vmem:[%s4 + $0x10] sm:$0xff]
    %v431 = vld [vmem:[%s4 + $0x18] sm:$0xff]
    %v432 = vld [vmem:[%s4 + $0x20] sm:$0xff]
    %v433 = vld [vmem:[%s4 + $0x28] sm:$0xff]
    %v434 = vld [vmem:[%s4 + $0x30] sm:$0xff]
    %v435 = vld [vmem:[%s4 + $0x38] sm:$0xff]
    %v436 = vld [vmem:[%s4 + $0x40] sm:$0xff]
    %v437 = vld [vmem:[%s4 + $0x48] sm:$0xff]
    %v438 = vld [vmem:[%s4 + $0x50] sm:$0xff]
    %v439 = vld [vmem:[%s4 + $0x58] sm:$0xff]
    %v440 = vld [vmem:[%s4 + $0x60] sm:$0xff]
    %v441 = vld [vmem:[%s4 + $0x68] sm:$0xff]
    %v442 = vld [vmem:[%s4 + $0x70] sm:$0xff]
    %v443 = vld [vmem:[%s4 + $0x78] sm:$0xff]
    %444 = vmatprep.subr.mxu0 0.0
    %445 = vmatpush1.msra.mxu0 %v443
    %446 = vmatprep.subr.mxu0 0.0
    %447 = vmatpush1.msra.mxu0 %v442
    %448 = vmatprep.subr.mxu0 0.0
    %449 = vmatpush1.msra.mxu0 %v441
    %450 = vmatprep.subr.mxu0 0.0
    %451 = vmatpush1.msra.mxu0 %v440
    %452 = vmatprep.subr.mxu0 0.0
    %453 = vmatpush1.msra.mxu0 %v439
    %454 = vmatprep.subr.mxu0 0.0
    %455 = vmatpush1.msra.mxu0 %v438
    %456 = vmatprep.subr.mxu0 0.0
    %457 = vmatpush1.msra.mxu0 %v437
    %458 = vmatprep.subr.mxu0 0.0
    %459 = vmatpush1.msra.mxu0 %v436
    %460 = vmatprep.subr.mxu0 0.0
    %461 = vmatpush1.msra.mxu0 %v435
    %462 = vmatprep.subr.mxu0 0.0
    %463 = vmatpush1.msra.mxu0 %v434
    %464 = vmatprep.subr.mxu0 0.0
    %465 = vmatpush1.msra.mxu0 %v433
    %466 = vmatprep.subr.mxu0 0.0
    %467 = vmatpush1.msra.mxu0 %v432
    %468 = vmatprep.subr.mxu0 0.0
    %469 = vmatpush1.msra.mxu0 %v431
    %470 = vmatprep.subr.mxu0 0.0
    %471 = vmatpush1.msra.mxu0 %v430
    %472 = vmatprep.subr.mxu0 0.0
    %473 = vmatpush1.msra.mxu0 %v429
    %474 = vmatprep.subr.mxu0 0.0
    %475 = vmatpush1.msra.mxu0 %v428
    %476 = vmatprep.subr.mxu0 0.0
    %477 = vmatpush2.msra.mxu0 0.0
    %478 = vmatprep.subr.mxu0 0.0
    %479 = vmatpush2.msra.mxu0 0.0
    %480 = vmatprep.subr.mxu0 0.0
    %481 = vmatpush2.msra.mxu0 0.0
    %482 = vmatprep.subr.mxu0 0.0
    %483 = vmatpush2.msra.mxu0 0.0
    %484 = vmatprep.subr.mxu0 0.0
    %485 = vmatpush2.msra.mxu0 0.0
    %486 = vmatprep.subr.mxu0 0.0
    %487 = vmatpush2.msra.mxu0 0.0
    %488 = vmatprep.subr.mxu0 0.0
    %489 = vmatpush2.msra.mxu0 0.0
    %490 = vmatprep.subr.mxu0 0.0
    %491 = vmatpush2.msra.mxu0 0.0
    %492 = vmatprep.subr.mxu0 0.0
    %493 = vmatpush2.msra.mxu0 0.0
    %494 = vmatprep.subr.mxu0 0.0
    %495 = vmatpush2.msra.mxu0 0.0
    %496 = vmatprep.subr.mxu0 0.0
    %497 = vmatpush2.msra.mxu0 0.0
    %498 = vmatprep.subr.mxu0 0.0
    %499 = vmatpush2.msra.mxu0 0.0
    %500 = vmatprep.subr.mxu0 0.0
    %501 = vmatpush2.msra.mxu0 0.0
    %502 = vmatprep.subr.mxu0 0.0
    %503 = vmatpush2.msra.mxu0 0.0
    %504 = vmatprep.subr.mxu0 0.0
    %505 = vmatpush2.msra.mxu0 0.0
    %506 = vmatprep.subr.mxu0 0.0
    %507 = vmatpush2.msra.mxu0 0.0
    %508 = vmatprep.mubr.f32.mxu0 0.0
    %509 = vmatmul.mubr.f32.gmra.mxu0 %v412
    %v510 = vpop.f32.mrf.mxu0
    %v511 = vadd.f32 0.0, %v510
    %v512 = vpop.f32.mrf.mxu0
    %513 = vmatprep.mubr.f32.mxu0 0.0
    %514 = vmatmul.mubr.f32.gmra.mxu0 %v413
    %v515 = vpop.f32.mrf.mxu0
    %v516 = vadd.f32 0.0, %v515
    %v517 = vpop.f32.mrf.mxu0
    %518 = vmatprep.mubr.f32.mxu0 0.0
    %519 = vmatmul.mubr.f32.gmra.mxu0 %v414
    %v520 = vpop.f32.mrf.mxu0
    %v521 = vadd.f32 0.0, %v520
    %v522 = vpop.f32.mrf.mxu0
    %523 = vmatprep.mubr.f32.mxu0 0.0
    %524 = vmatmul.mubr.f32.gmra.mxu0 %v415
    %v525 = vpop.f32.mrf.mxu0
    %v526 = vadd.f32 0.0, %v525
    %v527 = vpop.f32.mrf.mxu0
    %528 = vmatprep.mubr.f32.mxu0 0.0
    %529 = vmatmul.mubr.f32.gmra.mxu0 %v416
    %v530 = vpop.f32.mrf.mxu0
    %v531 = vadd.f32 0.0, %v530
    %v532 = vpop.f32.mrf.mxu0
    %533 = vmatprep.mubr.f32.mxu0 0.0
    %534 = vmatmul.mubr.f32.gmra.mxu0 %v417
    %v535 = vpop.f32.mrf.mxu0
    %v536 = vadd.f32 0.0, %v535
    %v537 = vpop.f32.mrf.mxu0
    %538 = vmatprep.mubr.f32.mxu0 0.0
    %539 = vmatmul.mubr.f32.gmra.mxu0 %v418
    %v540 = vpop.f32.mrf.mxu0
    %v541 = vadd.f32 0.0, %v540
    %v542 = vpop.f32.mrf.mxu0
    %543 = vmatprep.mubr.f32.mxu0 0.0
    %544 = vmatmul.mubr.f32.gmra.mxu0 %v419
    %v545 = vpop.f32.mrf.mxu0
    %v546 = vadd.f32 0.0, %v545
    %v547 = vpop.f32.mrf.mxu0
    %548 = vmatprep.mubr.f32.mxu0 0.0
    %549 = vmatmul.mubr.f32.gmra.mxu0 %v420
    %v550 = vpop.f32.mrf.mxu0
    %v551 = vadd.f32 0.0, %v550
    %v552 = vpop.f32.mrf.mxu0
    %553 = vmatprep.mubr.f32.mxu0 0.0
    %554 = vmatmul.mubr.f32.gmra.mxu0 %v421
    %v555 = vpop.f32.mrf.mxu0
    %v556 = vadd.f32 0.0, %v555
    %v557 = vpop.f32.mrf.mxu0
    %558 = vmatprep.mubr.f32.mxu0 0.0
    %559 = vmatmul.mubr.f32.gmra.mxu0 %v422
    %v560 = vpop.f32.mrf.mxu0
    %v561 = vadd.f32 0.0, %v560
    %v562 = vpop.f32.mrf.mxu0
    %563 = vmatprep.mubr.f32.mxu0 0.0
    %564 = vmatmul.mubr.f32.gmra.mxu0 %v423
    %v565 = vpop.f32.mrf.mxu0
    %v566 = vadd.f32 0.0, %v565
    %v567 = vpop.f32.mrf.mxu0
    %568 = vmatprep.mubr.f32.mxu0 0.0
    %569 = vmatmul.mubr.f32.gmra.mxu0 %v424
    %v570 = vpop.f32.mrf.mxu0
    %v571 = vadd.f32 0.0, %v570
    %v572 = vpop.f32.mrf.mxu0
    %573 = vmatprep.mubr.f32.mxu0 0.0
    %574 = vmatmul.mubr.f32.gmra.mxu0 %v425
    %v575 = vpop.f32.mrf.mxu0
    %v576 = vadd.f32 0.0, %v575
    %v577 = vpop.f32.mrf.mxu0
    %578 = vmatprep.mubr.f32.mxu0 0.0
    %579 = vmatmul.mubr.f32.gmra.mxu0 %v426
    %v580 = vpop.f32.mrf.mxu0
    %v581 = vadd.f32 0.0, %v580
    %v582 = vpop.f32.mrf.mxu0
    %583 = vmatprep.mubr.f32.mxu0 0.0
    %584 = vmatmul.mubr.f32.gmra.mxu0 %v427
    %v585 = vpop.f32.mrf.mxu0
    %v586 = vadd.f32 0.0, %v585
    %v587 = vpop.f32.mrf.mxu0
    %588 = vdwg.mxu0
    %v589 = vld [vmem:[%s5] sm:$0x1]
    %v591 = vlaneseq
    %v592 = vshrl.u32 %v591, 7
    %v593 = vsub.s32 0, %v592
    %v594 = vrot.slane %v589, %v593
    %596 = vmatprep.subr.mxu0 0.0
    %597 = vmatpush1.msra.mxu0 %v586
    %598 = vmatprep.subr.mxu0 0.0
    %599 = vmatpush1.msra.mxu0 %v581
    %600 = vmatprep.subr.mxu0 0.0
    %601 = vmatpush1.msra.mxu0 %v576
    %602 = vmatprep.subr.mxu0 0.0
    %603 = vmatpush1.msra.mxu0 %v571
    %604 = vmatprep.subr.mxu0 0.0
    %605 = vmatpush1.msra.mxu0 %v566
    %606 = vmatprep.subr.mxu0 0.0
    %607 = vmatpush1.msra.mxu0 %v561
    %608 = vmatprep.subr.mxu0 0.0
    %609 = vmatpush1.msra.mxu0 %v556
    %610 = vmatprep.subr.mxu0 0.0
    %611 = vmatpush1.msra.mxu0 %v551
    %612 = vmatprep.subr.mxu0 0.0
    %613 = vmatpush1.msra.mxu0 %v546
    %614 = vmatprep.subr.mxu0 0.0
    %615 = vmatpush1.msra.mxu0 %v541
    %616 = vmatprep.subr.mxu0 0.0
    %617 = vmatpush1.msra.mxu0 %v536
    %618 = vmatprep.subr.mxu0 0.0
    %619 = vmatpush1.msra.mxu0 %v531
    %620 = vmatprep.subr.mxu0 0.0
    %621 = vmatpush1.msra.mxu0 %v526
    %622 = vmatprep.subr.mxu0 0.0
    %623 = vmatpush1.msra.mxu0 %v521
    %624 = vmatprep.subr.mxu0 0.0
    %625 = vmatpush1.msra.mxu0 %v516
    %626 = vmatprep.subr.mxu0 0.0
    %627 = vmatpush1.msra.mxu0 %v511
    %628 = vmatprep.subr.mxu0 0.0
    %629 = vmatpush2.msra.mxu0 0.0
    %630 = vmatprep.subr.mxu0 0.0
    %631 = vmatpush2.msra.mxu0 0.0
    %632 = vmatprep.subr.mxu0 0.0
    %633 = vmatpush2.msra.mxu0 0.0
    %634 = vmatprep.subr.mxu0 0.0
    %635 = vmatpush2.msra.mxu0 0.0
    %636 = vmatprep.subr.mxu0 0.0
    %637 = vmatpush2.msra.mxu0 0.0
    %638 = vmatprep.subr.mxu0 0.0
    %639 = vmatpush2.msra.mxu0 0.0
    %640 = vmatprep.subr.mxu0 0.0
    %641 = vmatpush2.msra.mxu0 0.0
    %642 = vmatprep.subr.mxu0 0.0
    %643 = vmatpush2.msra.mxu0 0.0
    %644 = vmatprep.subr.mxu0 0.0
    %645 = vmatpush2.msra.mxu0 0.0
    %646 = vmatprep.subr.mxu0 0.0
    %647 = vmatpush2.msra.mxu0 0.0
    %648 = vmatprep.subr.mxu0 0.0
    %649 = vmatpush2.msra.mxu0 0.0
    %650 = vmatprep.subr.mxu0 0.0
    %651 = vmatpush2.msra.mxu0 0.0
    %652 = vmatprep.subr.mxu0 0.0
    %653 = vmatpush2.msra.mxu0 0.0
    %654 = vmatprep.subr.mxu0 0.0
    %655 = vmatpush2.msra.mxu0 0.0
    %656 = vmatprep.subr.mxu0 0.0
    %657 = vmatpush2.msra.mxu0 0.0
    %658 = vmatprep.subr.mxu0 0.0
    %659 = vmatpush2.msra.mxu0 0.0
    %660 = vmatprep.mubr.f32.mxu0 0.0
    %661 = vmatmul.mubr.f32.gmra.mxu0 %v67
    %v662 = vpop.f32.mrf.mxu0
    %v663 = vadd.f32 %v594, %v662
    %v664 = vpop.f32.mrf.mxu0
    %665 = vmatprep.mubr.f32.mxu0 0.0
    %666 = vmatmul.mubr.f32.gmra.mxu0 %v68
    %v667 = vpop.f32.mrf.mxu0
    %v668 = vadd.f32 %v594, %v667
    %v669 = vpop.f32.mrf.mxu0
    %670 = vmatprep.mubr.f32.mxu0 0.0
    %671 = vmatmul.mubr.f32.gmra.mxu0 %v69
    %v672 = vpop.f32.mrf.mxu0
    %v673 = vadd.f32 %v594, %v672
    %v674 = vpop.f32.mrf.mxu0
    %675 = vmatprep.mubr.f32.mxu0 0.0
    %676 = vmatmul.mubr.f32.gmra.mxu0 %v70
    %v677 = vpop.f32.mrf.mxu0
    %v678 = vadd.f32 %v594, %v677
    %v679 = vpop.f32.mrf.mxu0
    %680 = vmatprep.mubr.f32.mxu0 0.0
    %681 = vmatmul.mubr.f32.gmra.mxu0 %v71
    %v682 = vpop.f32.mrf.mxu0
    %v683 = vadd.f32 %v594, %v682
    %v684 = vpop.f32.mrf.mxu0
    %685 = vmatprep.mubr.f32.mxu0 0.0
    %686 = vmatmul.mubr.f32.gmra.mxu0 %v72
    %v687 = vpop.f32.mrf.mxu0
    %v688 = vadd.f32 %v594, %v687
    %v689 = vpop.f32.mrf.mxu0
    %690 = vmatprep.mubr.f32.mxu0 0.0
    %691 = vmatmul.mubr.f32.gmra.mxu0 %v73
    %v692 = vpop.f32.mrf.mxu0
    %v693 = vadd.f32 %v594, %v692
    %v694 = vpop.f32.mrf.mxu0
    %695 = vmatprep.mubr.f32.mxu0 0.0
    %696 = vmatmul.mubr.f32.gmra.mxu0 %v74
    %v697 = vpop.f32.mrf.mxu0
    %v698 = vadd.f32 %v594, %v697
    %v699 = vpop.f32.mrf.mxu0
    %700 = vmatprep.mubr.f32.mxu0 0.0
    %701 = vmatmul.mubr.f32.gmra.mxu0 %v75
    %v702 = vpop.f32.mrf.mxu0
    %v703 = vadd.f32 %v594, %v702
    %v704 = vpop.f32.mrf.mxu0
    %705 = vmatprep.mubr.f32.mxu0 0.0
    %706 = vmatmul.mubr.f32.gmra.mxu0 %v76
    %v707 = vpop.f32.mrf.mxu0
    %v708 = vadd.f32 %v594, %v707
    %v709 = vpop.f32.mrf.mxu0
    %710 = vmatprep.mubr.f32.mxu0 0.0
    %711 = vmatmul.mubr.f32.gmra.mxu0 %v77
    %v712 = vpop.f32.mrf.mxu0
    %v713 = vadd.f32 %v594, %v712
    %v714 = vpop.f32.mrf.mxu0
    %715 = vmatprep.mubr.f32.mxu0 0.0
    %716 = vmatmul.mubr.f32.gmra.mxu0 %v78
    %v717 = vpop.f32.mrf.mxu0
    %v718 = vadd.f32 %v594, %v717
    %v719 = vpop.f32.mrf.mxu0
    %720 = vmatprep.mubr.f32.mxu0 0.0
    %721 = vmatmul.mubr.f32.gmra.mxu0 %v79
    %v722 = vpop.f32.mrf.mxu0
    %v723 = vadd.f32 %v594, %v722
    %v724 = vpop.f32.mrf.mxu0
    %725 = vmatprep.mubr.f32.mxu0 0.0
    %726 = vmatmul.mubr.f32.gmra.mxu0 %v80
    %v727 = vpop.f32.mrf.mxu0
    %v728 = vadd.f32 %v594, %v727
    %v729 = vpop.f32.mrf.mxu0
    %730 = vmatprep.mubr.f32.mxu0 0.0
    %731 = vmatmul.mubr.f32.gmra.mxu0 %v81
    %v732 = vpop.f32.mrf.mxu0
    %v733 = vadd.f32 %v594, %v732
    %v734 = vpop.f32.mrf.mxu0
    %735 = vmatprep.mubr.f32.mxu0 0.0
    %736 = vmatmul.mubr.f32.gmra.mxu0 %v82
    %v737 = vpop.f32.mrf.mxu0
    %v738 = vadd.f32 %v594, %v737
    %v739 = vpop.f32.mrf.mxu0
    %740 = vdwg.mxu0
    %741 = vst [vmem:[%s6] sm:$0xff] %v663
    %742 = vst [vmem:[%s6 + $0x8] sm:$0xff] %v668
    %743 = vst [vmem:[%s6 + $0x10] sm:$0xff] %v673
    %744 = vst [vmem:[%s6 + $0x18] sm:$0xff] %v678
    %745 = vst [vmem:[%s6 + $0x20] sm:$0xff] %v683
    %746 = vst [vmem:[%s6 + $0x28] sm:$0xff] %v688
    %747 = vst [vmem:[%s6 + $0x30] sm:$0xff] %v693
    %748 = vst [vmem:[%s6 + $0x38] sm:$0xff] %v698
    %749 = vst [vmem:[%s6 + $0x40] sm:$0xff] %v703
    %750 = vst [vmem:[%s6 + $0x48] sm:$0xff] %v708
    %751 = vst [vmem:[%s6 + $0x50] sm:$0xff] %v713
    %752 = vst [vmem:[%s6 + $0x58] sm:$0xff] %v718
    %753 = vst [vmem:[%s6 + $0x60] sm:$0xff] %v723
    %754 = vst [vmem:[%s6 + $0x68] sm:$0xff] %v728
    %755 = vst [vmem:[%s6 + $0x70] sm:$0xff] %v733
    %756 = vst [vmem:[%s6 + $0x78] sm:$0xff] %v738
    // Predicated region
    $region34: #{forward.1} parent=1 // pred_check
      _
    $region35: #{forward.1} parent=1 // pred_check_branch
      %758 = sbr.rel (0) target = $region37
    $region36: #{forward.1} parent=1 // pred_region
      _
    $region37: #{forward.1} parent=1 // pred_fallthru
      _
    // Predicated region
    $region38: #{forward.1} parent=1 // pred_check
      _
    $region39: #{forward.1} parent=1 // pred_check_branch
      %760 = sbr.rel (0) target = $region41
    $region40: #{forward.1} parent=1 // pred_region
      _
    $region41: #{forward.1} parent=1 // pred_fallthru
      _
    %761 = vsyncpa [#allocation3], 1
    %762 = vsyncpa [#allocation5], 1

</llo_original>
